<compile_context>
chip_gen: v5e
topology: v5e:2x2
jax: 0.10.0
libtpu: 0.0.40
codegen_flags: <defaults>
</compile_context>

<pallas_src>
import functools

import jax
import jax.numpy as jnp
from jax.experimental import pallas as pl
from jax.experimental.pallas import tpu as pltpu

_BN_EPS = 1e-5


def _decoder_final_kernel(x_ref,      # (B, dx)       first half of cat(x, out)
                          o_ref,      # (B, dout)     second half of cat(x, out)
                          w1x_ref,    # (dx, H)       fc1 rows for x   (BN1 folded)
                          w1o_ref,    # (dout, H)     fc1 rows for out (BN1 folded)
                          b1_ref,     # (1, H)        fc1 bias         (BN1 folded)
                          w2_ref,     # (L, H, H)     fc2[i] weights   (BN2 folded)
                          b2_ref,     # (L, 1, H)     fc2[i] biases    (BN2 folded)
                          w3_ref,     # (H, O_pad)    fc3 weights, zero-padded cols
                          b3_ref,     # (1, O_pad)    fc3 bias, zero-padded
                          out_ref):   # (B, O_pad)    logits (lane-dense)
    # fc1 over the (virtually) concatenated [x, out] input: split matmul.
    h = jnp.dot(x_ref[...], w1x_ref[...], preferred_element_type=jnp.float32)
    h = h + jnp.dot(o_ref[...], w1o_ref[...], preferred_element_type=jnp.float32)
    h = jnp.maximum(h + b1_ref[...], 0.0)

    # Hidden stack. Dropout is identity at inference; BN2[i] folded into w2/b2.
    # TODO(synk): training-mode dropout (pltpu.prng_*) and batch-statistic BN
    #             are not implemented; this is the eval-mode forward pass.
    for i in range(w2_ref.shape[0]):          # static unroll over n_layer
        h = jnp.maximum(
            jnp.dot(h, w2_ref[i], preferred_element_type=jnp.float32) + b2_ref[i],
            0.0)

    # fc3 (output columns zero-padded to a multiple of 128 for unmasked stores).
    out_ref[...] = (jnp.dot(h, w3_ref[...], preferred_element_type=jnp.float32)
                    + b3_ref[...])


def fold_and_pack_params(params, eps=_BN_EPS):
    """Fold eval-mode BatchNorm into the Linear layers, pre-transpose weights to
    (in, out), and zero-pad fc3 to a lane-dense multiple of 128 columns."""
    # fc1 + bn1
    s1 = params["bn1_gamma"] / jnp.sqrt(params["bn1_var"] + eps)          # (H,)
    w1f = params["fc1_w"].T * s1[None, :]                                  # (n_latent, H)
    b1f = (params["fc1_b"] - params["bn1_mean"]) * s1 + params["bn1_beta"]

    # fc2 stack + bn2 stack
    s2 = params["bn2_gamma"] / jnp.sqrt(params["bn2_var"] + eps)           # (L, H)
    w2f = jnp.transpose(params["fc2_w"], (0, 2, 1)) * s2[:, None, :]       # (L, H, H)
    b2f = (params["fc2_b"] - params["bn2_mean"]) * s2 + params["bn2_beta"]  # (L, H)

    # fc3, padded to lane-dense width
    O = params["fc3_w"].shape[0]
    O_pad = ((O + 127) // 128) * 128
    w3f = jnp.pad(params["fc3_w"].T, ((0, 0), (0, O_pad - O)))             # (H, O_pad)
    b3f = jnp.pad(params["fc3_b"], (0, O_pad - O))                         # (O_pad,)

    return {
        "w1f": w1f, "b1f": b1f[None, :],
        "w2f": w2f, "b2f": b2f[:, None, :],
        "w3f": w3f, "b3f": b3f[None, :],
    }


@functools.partial(jax.jit, static_argnames=("lenPred", "n_categories"))
def decoder_final_forward(x, out, packed, *, lenPred, n_categories):
    """x: (B, dx), out: (B, dout) with dx + dout == n_latent.
    Returns (B, lenPred, n_categories) float32 logits."""
    B, dx = x.shape
    dout = out.shape[1]

    w1f, b1f = packed["w1f"], packed["b1f"]
    w2f, b2f = packed["w2f"], packed["b2f"]
    w3f, b3f = packed["w3f"], packed["b3f"]

    H = w1f.shape[1]
    L = w2f.shape[0]
    O_pad = w3f.shape[1]
    O = lenPred * n_categories

    w1x, w1o = w1f[:dx], w1f[dx:]     # static-shape split of the folded fc1

    logits_pad = pl.pallas_call(
        _decoder_final_kernel,
        grid=(1,),
        in_specs=[
            pl.BlockSpec((B, dx),      lambda i: (0, 0)),
            pl.BlockSpec((B, dout),    lambda i: (0, 0)),
            pl.BlockSpec((dx, H),      lambda i: (0, 0)),
            pl.BlockSpec((dout, H),    lambda i: (0, 0)),
            pl.BlockSpec((1, H),       lambda i: (0, 0)),
            pl.BlockSpec((L, H, H),    lambda i: (0, 0, 0)),
            pl.BlockSpec((L, 1, H),    lambda i: (0, 0, 0)),
            pl.BlockSpec((H, O_pad),   lambda i: (0, 0)),
            pl.BlockSpec((1, O_pad),   lambda i: (0, 0)),
        ],
        out_specs=pl.BlockSpec((B, O_pad), lambda i: (0, 0)),
        out_shape=jax.ShapeDtypeStruct((B, O_pad), jnp.float32),
        compiler_params=pltpu.CompilerParams(
            dimension_semantics=("arbitrary",)),
    )(x, out, w1x, w1o, b1f, w2f, b2f, w3f, b3f)

    return logits_pad[:, :O].reshape(-1, lenPred, n_categories)


def init_params(key, n_latent, n_hidden, lenPred, n_categories, n_layer):
    """Deterministic synthetic parameters matching nn.Linear / nn.BatchNorm1d shapes."""
    H, L = n_hidden, n_layer
    O = lenPred * n_categories
    ks = jax.random.split(key, 14)

    def u(k, shape, fan_in):
        bound = 1.0 / jnp.sqrt(jnp.float32(fan_in))
        return jax.random.uniform(k, shape, jnp.float32, -bound, bound)

    return {
        "fc1_w": u(ks[0], (H, n_latent), n_latent),
        "fc1_b": u(ks[1], (H,), n_latent),
        "bn1_gamma": 1.0 + 0.1 * jax.random.normal(ks[2], (H,), jnp.float32),
        "bn1_beta": 0.1 * jax.random.normal(ks[3], (H,), jnp.float32),
        "bn1_mean": 0.1 * jax.random.normal(ks[4], (H,), jnp.float32),
        "bn1_var": jax.random.uniform(ks[5], (H,), jnp.float32, 0.5, 1.5),
        "fc2_w": u(ks[6], (L, H, H), H),
        "fc2_b": u(ks[7], (L, H), H),
        "bn2_gamma": 1.0 + 0.1 * jax.random.normal(ks[8], (L, H), jnp.float32),
        "bn2_beta": 0.1 * jax.random.normal(ks[9], (L, H), jnp.float32),
        "bn2_mean": 0.1 * jax.random.normal(ks[10], (L, H), jnp.float32),
        "bn2_var": jax.random.uniform(ks[11], (L, H), jnp.float32, 0.5, 1.5),
        "fc3_w": u(ks[12], (O, H), H),
        "fc3_b": u(ks[13], (O,), H),
    }


def _reference_forward(x, out, params, lenPred, n_categories, eps=_BN_EPS):
    """Pure-JAX mirror of the PyTorch eval-mode forward (for a sanity check)."""
    h = jnp.concatenate([x, out], axis=1)
    h = h @ params["fc1_w"].T + params["fc1_b"]
    h = ((h - params["bn1_mean"]) / jnp.sqrt(params["bn1_var"] + eps)
         * params["bn1_gamma"] + params["bn1_beta"])
    h = jnp.maximum(h, 0.0)
    for i in range(params["fc2_w"].shape[0]):
        h = h @ params["fc2_w"][i].T + params["fc2_b"][i]
        h = ((h - params["bn2_mean"][i]) / jnp.sqrt(params["bn2_var"][i] + eps)
             * params["bn2_gamma"][i] + params["bn2_beta"][i])
        h = jnp.maximum(h, 0.0)
    h = h @ params["fc3_w"].T + params["fc3_b"]
    return h.reshape(-1, lenPred, n_categories)


if __name__ == "__main__":
    n_categories = 25
    n_hidden = 128
    lenPred = 4
    n_layer = 2
    dim_x, dim_out = 20, 12          # forward does cat(x, out) -> n_latent = 32
    n_latent = dim_x + dim_out
    B = 8                            # fills the 8 sublanes of a vreg

    key = jax.random.PRNGKey(0)
    kp, kx, ko = jax.random.split(key, 3)
    params = init_params(kp, n_latent, n_hidden, lenPred, n_categories, n_layer)
    x = jax.random.normal(kx, (B, dim_x), jnp.float32)
    out_feat = jax.random.normal(ko, (B, dim_out), jnp.float32)

    packed = fold_and_pack_params(params)
    y = decoder_final_forward(x, out_feat, packed,
                              lenPred=lenPred, n_categories=n_categories)
    jax.block_until_ready(y)

    ref = _reference_forward(x, out_feat, params, lenPred, n_categories)
    assert y.shape == (B, lenPred, n_categories)
    max_err = float(jnp.max(jnp.abs(y - ref)))
    assert jnp.allclose(y, ref, atol=2e-2, rtol=2e-2), max_err

    print("KERNEL_OK")
</pallas_src>

<mosaic_0001>
module attributes {stable_mosaic.version = 11 : i64} {
  func.func @_decoder_final_kernel(%arg0: i32, %arg1: memref<8x20xf32, #tpu.memory_space<vmem>>, %arg2: memref<8x12xf32, #tpu.memory_space<vmem>>, %arg3: memref<20x128xf32, #tpu.memory_space<vmem>>, %arg4: memref<12x128xf32, #tpu.memory_space<vmem>>, %arg5: memref<1x128xf32, #tpu.memory_space<vmem>>, %arg6: memref<2x128x128xf32, #tpu.memory_space<vmem>>, %arg7: memref<2x1x128xf32, #tpu.memory_space<vmem>>, %arg8: memref<128x128xf32, #tpu.memory_space<vmem>>, %arg9: memref<1x128xf32, #tpu.memory_space<vmem>>, %arg10: memref<8x128xf32, #tpu.memory_space<vmem>>) attributes {dimension_semantics = [#tpu.dimension_semantics<arbitrary>], iteration_bounds = array<i64: 1>, scalar_prefetch = 0 : i64, scratch_operands = 0 : i64, tpu.core_type = #tpu.core_type<tc>, window_params = [{pipeline_mode = #tpu.pipeline_mode<synchronous>, transform_indices = @transform_0, window_bounds = array<i64: 8, 20>}, {pipeline_mode = #tpu.pipeline_mode<synchronous>, transform_indices = @transform_1, window_bounds = array<i64: 8, 12>}, {pipeline_mode = #tpu.pipeline_mode<synchronous>, transform_indices = @transform_2, window_bounds = array<i64: 20, 128>}, {pipeline_mode = #tpu.pipeline_mode<synchronous>, transform_indices = @transform_3, window_bounds = array<i64: 12, 128>}, {pipeline_mode = #tpu.pipeline_mode<synchronous>, transform_indices = @transform_4, window_bounds = array<i64: 1, 128>}, {pipeline_mode = #tpu.pipeline_mode<synchronous>, transform_indices = @transform_5, window_bounds = array<i64: 2, 128, 128>}, {pipeline_mode = #tpu.pipeline_mode<synchronous>, transform_indices = @transform_6, window_bounds = array<i64: 2, 1, 128>}, {pipeline_mode = #tpu.pipeline_mode<synchronous>, transform_indices = @transform_7, window_bounds = array<i64: 128, 128>}, {pipeline_mode = #tpu.pipeline_mode<synchronous>, transform_indices = @transform_8, window_bounds = array<i64: 1, 128>}, {pipeline_mode = #tpu.pipeline_mode<synchronous>, transform_indices = @transform_9, window_bounds = array<i64: 8, 128>}]} {
    %c0 = arith.constant 0 : index
    %c0_0 = arith.constant 0 : index
    %0 = vector.load %arg1[%c0, %c0_0] : memref<8x20xf32, #tpu.memory_space<vmem>>, vector<8x20xf32>
    %c0_1 = arith.constant 0 : index
    %c0_2 = arith.constant 0 : index
    %1 = vector.load %arg3[%c0_1, %c0_2] : memref<20x128xf32, #tpu.memory_space<vmem>>, vector<20x128xf32>
    %cst = arith.constant dense<0.000000e+00> : vector<8x128xf32>
    %2 = tpu.matmul %0, %1, %cst {dimension_numbers = #tpu.dot_dimension_numbers<[1], [0], [0], [1], [0, 0, 1, 1], [], []>} : vector<8x20xf32>, vector<20x128xf32>, vector<8x128xf32> -> vector<8x128xf32>
    %c0_3 = arith.constant 0 : index
    %c0_4 = arith.constant 0 : index
    %3 = vector.load %arg2[%c0_3, %c0_4] : memref<8x12xf32, #tpu.memory_space<vmem>>, vector<8x12xf32>
    %c0_5 = arith.constant 0 : index
    %c0_6 = arith.constant 0 : index
    %4 = vector.load %arg4[%c0_5, %c0_6] : memref<12x128xf32, #tpu.memory_space<vmem>>, vector<12x128xf32>
    %cst_7 = arith.constant dense<0.000000e+00> : vector<8x128xf32>
    %5 = tpu.matmul %3, %4, %cst_7 {dimension_numbers = #tpu.dot_dimension_numbers<[1], [0], [0], [1], [0, 0, 1, 1], [], []>} : vector<8x12xf32>, vector<12x128xf32>, vector<8x128xf32> -> vector<8x128xf32>
    %6 = arith.addf %2, %5 : vector<8x128xf32>
    %c0_8 = arith.constant 0 : index
    %c0_9 = arith.constant 0 : index
    %7 = vector.load %arg5[%c0_8, %c0_9] : memref<1x128xf32, #tpu.memory_space<vmem>>, vector<1x128xf32>
    %8 = vector.broadcast %7 : vector<1x128xf32> to vector<8x128xf32>
    %9 = arith.addf %6, %8 : vector<8x128xf32>
    %cst_10 = arith.constant 0.000000e+00 : f32
    %10 = vector.broadcast %cst_10 : f32 to vector<8x128xf32>
    %11 = arith.maximumf %9, %10 : vector<8x128xf32>
    %c0_11 = arith.constant 0 : index
    %c0_12 = arith.constant 0 : index
    %c0_13 = arith.constant 0 : index
    %12 = vector.load %arg6[%c0_11, %c0_12, %c0_13] : memref<2x128x128xf32, #tpu.memory_space<vmem>>, vector<1x128x128xf32>
    %13 = vector.shape_cast %12 : vector<1x128x128xf32> to vector<128x128xf32>
    %cst_14 = arith.constant dense<0.000000e+00> : vector<8x128xf32>
    %14 = tpu.matmul %11, %13, %cst_14 {dimension_numbers = #tpu.dot_dimension_numbers<[1], [0], [0], [1], [0, 0, 1, 1], [], []>} : vector<8x128xf32>, vector<128x128xf32>, vector<8x128xf32> -> vector<8x128xf32>
    %c0_15 = arith.constant 0 : index
    %c0_16 = arith.constant 0 : index
    %c0_17 = arith.constant 0 : index
    %15 = vector.load %arg7[%c0_15, %c0_16, %c0_17] : memref<2x1x128xf32, #tpu.memory_space<vmem>>, vector<1x1x128xf32>
    %16 = vector.shape_cast %15 : vector<1x1x128xf32> to vector<1x128xf32>
    %17 = vector.broadcast %16 : vector<1x128xf32> to vector<8x128xf32>
    %18 = arith.addf %14, %17 : vector<8x128xf32>
    %cst_18 = arith.constant 0.000000e+00 : f32
    %19 = vector.broadcast %cst_18 : f32 to vector<8x128xf32>
    %20 = arith.maximumf %18, %19 : vector<8x128xf32>
    %c1 = arith.constant 1 : index
    %c0_19 = arith.constant 0 : index
    %c0_20 = arith.constant 0 : index
    %21 = vector.load %arg6[%c1, %c0_19, %c0_20] : memref<2x128x128xf32, #tpu.memory_space<vmem>>, vector<1x128x128xf32>
    %22 = vector.shape_cast %21 : vector<1x128x128xf32> to vector<128x128xf32>
    %cst_21 = arith.constant dense<0.000000e+00> : vector<8x128xf32>
    %23 = tpu.matmul %20, %22, %cst_21 {dimension_numbers = #tpu.dot_dimension_numbers<[1], [0], [0], [1], [0, 0, 1, 1], [], []>} : vector<8x128xf32>, vector<128x128xf32>, vector<8x128xf32> -> vector<8x128xf32>
    %c1_22 = arith.constant 1 : index
    %c0_23 = arith.constant 0 : index
    %c0_24 = arith.constant 0 : index
    %24 = vector.load %arg7[%c1_22, %c0_23, %c0_24] : memref<2x1x128xf32, #tpu.memory_space<vmem>>, vector<1x1x128xf32>
    %25 = vector.shape_cast %24 : vector<1x1x128xf32> to vector<1x128xf32>
    %26 = vector.broadcast %25 : vector<1x128xf32> to vector<8x128xf32>
    %27 = arith.addf %23, %26 : vector<8x128xf32>
    %cst_25 = arith.constant 0.000000e+00 : f32
    %28 = vector.broadcast %cst_25 : f32 to vector<8x128xf32>
    %29 = arith.maximumf %27, %28 : vector<8x128xf32>
    %c0_26 = arith.constant 0 : index
    %c0_27 = arith.constant 0 : index
    %30 = vector.load %arg8[%c0_26, %c0_27] : memref<128x128xf32, #tpu.memory_space<vmem>>, vector<128x128xf32>
    %cst_28 = arith.constant dense<0.000000e+00> : vector<8x128xf32>
    %31 = tpu.matmul %29, %30, %cst_28 {dimension_numbers = #tpu.dot_dimension_numbers<[1], [0], [0], [1], [0, 0, 1, 1], [], []>} : vector<8x128xf32>, vector<128x128xf32>, vector<8x128xf32> -> vector<8x128xf32>
    %c0_29 = arith.constant 0 : index
    %c0_30 = arith.constant 0 : index
    %32 = vector.load %arg9[%c0_29, %c0_30] : memref<1x128xf32, #tpu.memory_space<vmem>>, vector<1x128xf32>
    %33 = vector.broadcast %32 : vector<1x128xf32> to vector<8x128xf32>
    %34 = arith.addf %31, %33 : vector<8x128xf32>
    %c0_31 = arith.constant 0 : index
    %c0_32 = arith.constant 0 : index
    %35 = vector.load %arg10[%c0_31, %c0_32] : memref<8x128xf32, #tpu.memory_space<vmem>>, vector<8x128xf32>
    tpu.vector_store %arg10[%c0_31, %c0_32], %34 {strides = array<i32>} : memref<8x128xf32, #tpu.memory_space<vmem>>, vector<8x128xf32>,
    return
  }
  func.func @transform_0(%arg0: i32) -> (i32, i32) {
    %c0_i32 = arith.constant 0 : i32
    %c0_i32_0 = arith.constant 0 : i32
    %c0_i32_1 = arith.constant 0 : i32
    return %c0_i32, %c0_i32_0 : i32, i32
  }
  func.func @transform_1(%arg0: i32) -> (i32, i32) {
    %c0_i32 = arith.constant 0 : i32
    %c0_i32_0 = arith.constant 0 : i32
    %c0_i32_1 = arith.constant 0 : i32
    return %c0_i32, %c0_i32_0 : i32, i32
  }
  func.func @transform_2(%arg0: i32) -> (i32, i32) {
    %c0_i32 = arith.constant 0 : i32
    %c0_i32_0 = arith.constant 0 : i32
    %c0_i32_1 = arith.constant 0 : i32
    return %c0_i32, %c0_i32_0 : i32, i32
  }
  func.func @transform_3(%arg0: i32) -> (i32, i32) {
    %c0_i32 = arith.constant 0 : i32
    %c0_i32_0 = arith.constant 0 : i32
    %c0_i32_1 = arith.constant 0 : i32
    return %c0_i32, %c0_i32_0 : i32, i32
  }
  func.func @transform_4(%arg0: i32) -> (i32, i32) {
    %c0_i32 = arith.constant 0 : i32
    %c0_i32_0 = arith.constant 0 : i32
    %c0_i32_1 = arith.constant 0 : i32
    return %c0_i32, %c0_i32_0 : i32, i32
  }
  func.func @transform_5(%arg0: i32) -> (i32, i32, i32) {
    %c0_i32 = arith.constant 0 : i32
    %c0_i32_0 = arith.constant 0 : i32
    %c0_i32_1 = arith.constant 0 : i32
    %c0_i32_2 = arith.constant 0 : i32
    return %c0_i32, %c0_i32_0, %c0_i32_1 : i32, i32, i32
  }
  func.func @transform_6(%arg0: i32) -> (i32, i32, i32) {
    %c0_i32 = arith.constant 0 : i32
    %c0_i32_0 = arith.constant 0 : i32
    %c0_i32_1 = arith.constant 0 : i32
    %c0_i32_2 = arith.constant 0 : i32
    return %c0_i32, %c0_i32_0, %c0_i32_1 : i32, i32, i32
  }
  func.func @transform_7(%arg0: i32) -> (i32, i32) {
    %c0_i32 = arith.constant 0 : i32
    %c0_i32_0 = arith.constant 0 : i32
    %c0_i32_1 = arith.constant 0 : i32
    return %c0_i32, %c0_i32_0 : i32, i32
  }
  func.func @transform_8(%arg0: i32) -> (i32, i32) {
    %c0_i32 = arith.constant 0 : i32
    %c0_i32_0 = arith.constant 0 : i32
    %c0_i32_1 = arith.constant 0 : i32
    return %c0_i32, %c0_i32_0 : i32, i32
  }
  func.func @transform_9(%arg0: i32) -> (i32, i32) {
    %c0_i32 = arith.constant 0 : i32
    %c0_i32_0 = arith.constant 0 : i32
    %c0_i32_1 = arith.constant 0 : i32
    return %c0_i32, %c0_i32_0 : i32, i32
  }
}

</mosaic_0001>

<llo_original>
// kernel: decoder_final_forward.1
$region0: #{decoder_final_forward.1}
  #allocation0 [shape = 'u32[]', space=smem, size = 0x4, offset = 0x4, fixed_abs, tag = 'smem constant byte address 0x4 - core index']
  #allocation1 [shape = 'u32[72,128]{1,0:T(1,128)}', space=vmem, size = 0x9000, scoped, tag = 'internal scratch']
  %s0 = inlined_call_operand.vmem [shape: f32[8,20], index: 0, kind: input, shape index: {}]
  %s1 = inlined_call_operand.vmem [shape: f32[8,12], index: 1, kind: input, shape index: {}]
  %s2 = inlined_call_operand.vmem [shape: f32[20,128], index: 2, kind: input, shape index: {}]
  %s3 = inlined_call_operand.vmem [shape: f32[12,128], index: 3, kind: input, shape index: {}]
  %s4 = inlined_call_operand.vmem [shape: f32[1,128], index: 4, kind: input, shape index: {}]
  %s5 = inlined_call_operand.hbm [shape: f32[2,128,128], index: 5, kind: input, shape index: {}]
  %s6 = inlined_call_operand.vmem [shape: f32[2,1,128], index: 6, kind: input, shape index: {}]
  %s7 = inlined_call_operand.hbm [shape: f32[128,128], index: 7, kind: input, shape index: {}]
  %s8 = inlined_call_operand.vmem [shape: f32[1,128], index: 8, kind: input, shape index: {}]
  %s9 = inlined_call_operand.vmem [shape: f32[8,128], index: 9, kind: output, shape index: {}]
  %s10 = sld [smem:[#allocation0]]
  $region54: #{decoder_final_forward.1} parent=0
    _
  %s12 = ssub.s32 1, %s10
  %s13 = scalar_select 0, %s12, %s10
  $region1: #{decoder_final_forward.1} parent=0
    #allocation2 [shape = 'u8[131072]{0}', space=vmem, size = 0x20000, scoped, tag = 'input window, operand 5, single buffered']
    #allocation3 [shape = 's32[1]{0}', space=sflag, size = 0x4, scoped, tag = 'scoped memory for decoder_final_forward.1']
    #allocation4 [shape = 'u8[65536]{0}', space=vmem, size = 0x10000, scoped, tag = 'input window, operand 7, single buffered']
    #allocation5 [shape = 's32[1]{0}', space=sflag, size = 0x4, scoped, tag = 'scoped memory for decoder_final_forward.1']
    %14 = vsyncpa [#allocation3], 0
    %15 = vsyncpa [#allocation5], 0
    // Predicated region
    $region2: #{decoder_final_forward.1} parent=1 // pred_check
      _
    $region3: #{decoder_final_forward.1} parent=1 // pred_check_branch
      %17 = sbr.rel (0) target = $region5
    $region4: #{decoder_final_forward.1} parent=1 // pred_region
      _
    $region5: #{decoder_final_forward.1} parent=1 // pred_fallthru
      _
    // Predicated region
    $region6: #{decoder_final_forward.1} parent=1 // pred_check
      _
    $region7: #{decoder_final_forward.1} parent=1 // pred_check_branch
      %19 = sbr.rel (0) target = $region9
    $region8: #{decoder_final_forward.1} parent=1 // pred_region
      _
    $region9: #{decoder_final_forward.1} parent=1 // pred_fallthru
      _
    // Predicated region
    $region10: #{decoder_final_forward.1} parent=1 // pred_check
      _
    $region11: #{decoder_final_forward.1} parent=1 // pred_check_branch
      %21 = sbr.rel (0) target = $region13
    $region12: #{decoder_final_forward.1} parent=1 // pred_region
      _
    $region13: #{decoder_final_forward.1} parent=1 // pred_fallthru
      _
    // Predicated region
    $region14: #{decoder_final_forward.1} parent=1 // pred_check
      _
    $region15: #{decoder_final_forward.1} parent=1 // pred_check_branch
      %23 = sbr.rel (0) target = $region17
    $region16: #{decoder_final_forward.1} parent=1 // pred_region
      _
    $region17: #{decoder_final_forward.1} parent=1 // pred_fallthru
      _
    // Predicated region
    $region18: #{decoder_final_forward.1} parent=1 // pred_check
      _
    $region19: #{decoder_final_forward.1} parent=1 // pred_check_branch
      %25 = sbr.rel (0) target = $region21
    $region20: #{decoder_final_forward.1} parent=1 // pred_region
      _
    $region21: #{decoder_final_forward.1} parent=1 // pred_fallthru
      _
    // Predicated region
    $region22: #{decoder_final_forward.1} parent=1 // pred_check
      _
    $region23: #{decoder_final_forward.1} parent=1 // pred_check_branch
      %27 = sbr.rel (0) target = $region25
    $region24: #{decoder_final_forward.1} parent=1 // pred_region
      %29 = vsyncadd [#allocation3], 0
      %s30 = sshll.u32 %s5, 4
      %s31 = int_to_ptr.hbm [resolvable:$true] %s30
      %s32 = sshll.u32 [#allocation2], 4
      %s33 = int_to_ptr.vmem [resolvable:$true] %s32
      %38 = dma.hbm_to_vmem [thread:$0]  %s31, 4096, %s33, [#allocation3], 128, 128, 8
    $region25: #{decoder_final_forward.1} parent=1 // pred_fallthru
      _
    // Predicated region
    $region26: #{decoder_final_forward.1} parent=1 // pred_check
      _
    $region27: #{decoder_final_forward.1} parent=1 // pred_check_branch
      %40 = sbr.rel (0) target = $region29
    $region28: #{decoder_final_forward.1} parent=1 // pred_region
      _
    $region29: #{decoder_final_forward.1} parent=1 // pred_fallthru
      _
    // Predicated region
    $region30: #{decoder_final_forward.1} parent=1 // pred_check
      _
    $region31: #{decoder_final_forward.1} parent=1 // pred_check_branch
      %42 = sbr.rel (0) target = $region33
    $region32: #{decoder_final_forward.1} parent=1 // pred_region
      %44 = vsyncadd [#allocation5], 0
      %s45 = sshll.u32 %s7, 4
      %s46 = int_to_ptr.hbm [resolvable:$true] %s45
      %s47 = sshll.u32 [#allocation4], 4
      %s48 = int_to_ptr.vmem [resolvable:$true] %s47
      %53 = dma.hbm_to_vmem [thread:$0]  %s46, 2048, %s48, [#allocation5], 128, 128, 8
    $region33: #{decoder_final_forward.1} parent=1 // pred_fallthru
      _
    // Predicated region
    $region34: #{decoder_final_forward.1} parent=1 // pred_check
      _
    $region35: #{decoder_final_forward.1} parent=1 // pred_check_branch
      %55 = sbr.rel (0) target = $region37
    $region36: #{decoder_final_forward.1} parent=1 // pred_region
      _
    $region37: #{decoder_final_forward.1} parent=1 // pred_fallthru
      _
    // Predicated region
    $region38: #{decoder_final_forward.1} parent=1 // pred_check
      _
    $region39: #{decoder_final_forward.1} parent=1 // pred_check_branch
      %57 = sbr.rel (0) target = $region41
    $region40: #{decoder_final_forward.1} parent=1 // pred_region
      %59 = dma.done [#allocation3], 4096
    $region41: #{decoder_final_forward.1} parent=1 // pred_fallthru
      _
    // Predicated region
    $region42: #{decoder_final_forward.1} parent=1 // pred_check
      _
    $region43: #{decoder_final_forward.1} parent=1 // pred_check_branch
      %61 = sbr.rel (0) target = $region45
    $region44: #{decoder_final_forward.1} parent=1 // pred_region
      %63 = dma.done [#allocation5], 2048
    $region45: #{decoder_final_forward.1} parent=1 // pred_fallthru
      _
    %v64 = vld [vmem:[%s0] sm:$0xff]
    %v65 = vld [vmem:[%s2] sm:$0xff]
    %v66 = vld [vmem:[%s2 + $0x8] sm:$0xff]
    %v67 = vld [vmem:[%s2 + $0x10] sm:$0xf]
    %v68 = vld [vmem:[%s1] sm:$0xff]
    %v69 = vld [vmem:[%s3] sm:$0xff]
    %v70 = vld [vmem:[%s3 + $0x8] sm:$0xf]
    %vm71 = vcmask 97280
    %v73 = vsel %vm71, %v68, 0
    %vm75 = vcmask 1043456
    %v77 = vsel %vm75, %v70, 0
    %79 = vmatpush.msra.mxu0 0.0
    %80 = vmatpush.msra.mxu0 0.0
    %81 = vmatpush.msra.mxu0 0.0
    %82 = vmatpush.msra.mxu0 0.0
    %83 = vmatpush.msra.mxu0 0.0
    %84 = vmatpush.msra.mxu0 0.0
    %85 = vmatpush.msra.mxu0 0.0
    %86 = vmatpush.msra.mxu0 0.0
    %87 = vmatpush.msra.mxu0 0.0
    %88 = vmatpush.msra.mxu0 0.0
    %89 = vmatpush.msra.mxu0 0.0
    %90 = vmatpush.msra.mxu0 0.0
    %91 = vmatpush.msra.mxu0 0.0
    %92 = vmatpush.msra.mxu0 0.0
    %93 = vmatpush.msra.mxu0 %v77
    %94 = vmatpush.msra.mxu0 %v69
    %95 = vmatmul.f32.gmra.mxu0 %v73
    %v96 = vpop.f32.mrf.mxu0
    %v97 = vadd.f32 0.0, %v96
    %98 = vdwg.mxu0
    %vm99 = vcmask 162816
    %v101 = vsel %vm99, %v64, 0
    %v104 = vsel %vm75, %v67, 0
    %106 = vmatpush.msra.mxu0 0.0
    %107 = vmatpush.msra.mxu0 0.0
    %108 = vmatpush.msra.mxu0 0.0
    %109 = vmatpush.msra.mxu0 0.0
    %110 = vmatpush.msra.mxu0 0.0
    %111 = vmatpush.msra.mxu0 0.0
    %112 = vmatpush.msra.mxu0 0.0
    %113 = vmatpush.msra.mxu0 0.0
    %114 = vmatpush.msra.mxu0 0.0
    %115 = vmatpush.msra.mxu0 0.0
    %116 = vmatpush.msra.mxu0 0.0
    %117 = vmatpush.msra.mxu0 0.0
    %118 = vmatpush.msra.mxu0 0.0
    %119 = vmatpush.msra.mxu0 %v104
    %120 = vmatpush.msra.mxu0 %v66
    %121 = vmatpush.msra.mxu0 %v65
    %122 = vmatmul.f32.gmra.mxu0 %v101
    %v123 = vpop.f32.mrf.mxu0
    %v124 = vadd.f32 %v97, %v123
    %125 = vdwg.mxu0
    %v126 = vld [vmem:[%s4] sm:$0x1]
    %v128 = vperm.slane %v126, 0
    %v130 = vadd.f32 %v124, %v128
    %v131 = vmax.f32 %v130, 0.0
    %v132 = vld [vmem:[#allocation2] sm:$0xff]
    %v133 = vld [vmem:[#allocation2 + $0x8] sm:$0xff]
    %v134 = vld [vmem:[#allocation2 + $0x10] sm:$0xff]
    %v135 = vld [vmem:[#allocation2 + $0x18] sm:$0xff]
    %v136 = vld [vmem:[#allocation2 + $0x20] sm:$0xff]
    %v137 = vld [vmem:[#allocation2 + $0x28] sm:$0xff]
    %v138 = vld [vmem:[#allocation2 + $0x30] sm:$0xff]
    %v139 = vld [vmem:[#allocation2 + $0x38] sm:$0xff]
    %v140 = vld [vmem:[#allocation2 + $0x40] sm:$0xff]
    %v141 = vld [vmem:[#allocation2 + $0x48] sm:$0xff]
    %v142 = vld [vmem:[#allocation2 + $0x50] sm:$0xff]
    %v143 = vld [vmem:[#allocation2 + $0x58] sm:$0xff]
    %v144 = vld [vmem:[#allocation2 + $0x60] sm:$0xff]
    %v145 = vld [vmem:[#allocation2 + $0x68] sm:$0xff]
    %v146 = vld [vmem:[#allocation2 + $0x70] sm:$0xff]
    %v147 = vld [vmem:[#allocation2 + $0x78] sm:$0xff]
    %v148 = vld [vmem:[%s6] sm:$0x1]
    %v150 = vperm.slane %v148, 0
    %152 = vmatpush.msra.mxu0 %v147
    %153 = vmatpush.msra.mxu0 %v146
    %154 = vmatpush.msra.mxu0 %v145
    %155 = vmatpush.msra.mxu0 %v144
    %156 = vmatpush.msra.mxu0 %v143
    %157 = vmatpush.msra.mxu0 %v142
    %158 = vmatpush.msra.mxu0 %v141
    %159 = vmatpush.msra.mxu0 %v140
    %160 = vmatpush.msra.mxu0 %v139
    %161 = vmatpush.msra.mxu0 %v138
    %162 = vmatpush.msra.mxu0 %v137
    %163 = vmatpush.msra.mxu0 %v136
    %164 = vmatpush.msra.mxu0 %v135
    %165 = vmatpush.msra.mxu0 %v134
    %166 = vmatpush.msra.mxu0 %v133
    %167 = vmatpush.msra.mxu0 %v132
    %168 = vmatmul.f32.gmra.mxu0 %v131
    %v169 = vpop.f32.mrf.mxu0
    %v170 = vadd.f32 %v150, %v169
    %171 = vdwg.mxu0
    %v172 = vmax.f32 %v170, 0.0
    %s173 = scalar_lea.vmem [#allocation2], 128
    %v174 = vld [vmem:[%s173] sm:$0xff]
    %v175 = vld [vmem:[%s173 + $0x8] sm:$0xff]
    %v176 = vld [vmem:[%s173 + $0x10] sm:$0xff]
    %v177 = vld [vmem:[%s173 + $0x18] sm:$0xff]
    %v178 = vld [vmem:[%s173 + $0x20] sm:$0xff]
    %v179 = vld [vmem:[%s173 + $0x28] sm:$0xff]
    %v180 = vld [vmem:[%s173 + $0x30] sm:$0xff]
    %v181 = vld [vmem:[%s173 + $0x38] sm:$0xff]
    %v182 = vld [vmem:[%s173 + $0x40] sm:$0xff]
    %v183 = vld [vmem:[%s173 + $0x48] sm:$0xff]
    %v184 = vld [vmem:[%s173 + $0x50] sm:$0xff]
    %v185 = vld [vmem:[%s173 + $0x58] sm:$0xff]
    %v186 = vld [vmem:[%s173 + $0x60] sm:$0xff]
    %v187 = vld [vmem:[%s173 + $0x68] sm:$0xff]
    %v188 = vld [vmem:[%s173 + $0x70] sm:$0xff]
    %v189 = vld [vmem:[%s173 + $0x78] sm:$0xff]
    %s190 = scalar_lea.vmem %s6, 1
    %v191 = vld [vmem:[%s190] sm:$0x1]
    %v193 = vperm.slane %v191, 0
    %195 = vmatpush.msra.mxu0 %v189
    %196 = vmatpush.msra.mxu0 %v188
    %197 = vmatpush.msra.mxu0 %v187
    %198 = vmatpush.msra.mxu0 %v186
    %199 = vmatpush.msra.mxu0 %v185
    %200 = vmatpush.msra.mxu0 %v184
    %201 = vmatpush.msra.mxu0 %v183
    %202 = vmatpush.msra.mxu0 %v182
    %203 = vmatpush.msra.mxu0 %v181
    %204 = vmatpush.msra.mxu0 %v180
    %205 = vmatpush.msra.mxu0 %v179
    %206 = vmatpush.msra.mxu0 %v178
    %207 = vmatpush.msra.mxu0 %v177
    %208 = vmatpush.msra.mxu0 %v176
    %209 = vmatpush.msra.mxu0 %v175
    %210 = vmatpush.msra.mxu0 %v174
    %211 = vmatmul.f32.gmra.mxu0 %v172
    %v212 = vpop.f32.mrf.mxu0
    %v213 = vadd.f32 %v193, %v212
    %214 = vdwg.mxu0
    %v215 = vmax.f32 %v213, 0.0
    %v216 = vld [vmem:[#allocation4] sm:$0xff]
    %v217 = vld [vmem:[#allocation4 + $0x8] sm:$0xff]
    %v218 = vld [vmem:[#allocation4 + $0x10] sm:$0xff]
    %v219 = vld [vmem:[#allocation4 + $0x18] sm:$0xff]
    %v220 = vld [vmem:[#allocation4 + $0x20] sm:$0xff]
    %v221 = vld [vmem:[#allocation4 + $0x28] sm:$0xff]
    %v222 = vld [vmem:[#allocation4 + $0x30] sm:$0xff]
    %v223 = vld [vmem:[#allocation4 + $0x38] sm:$0xff]
    %v224 = vld [vmem:[#allocation4 + $0x40] sm:$0xff]
    %v225 = vld [vmem:[#allocation4 + $0x48] sm:$0xff]
    %v226 = vld [vmem:[#allocation4 + $0x50] sm:$0xff]
    %v227 = vld [vmem:[#allocation4 + $0x58] sm:$0xff]
    %v228 = vld [vmem:[#allocation4 + $0x60] sm:$0xff]
    %v229 = vld [vmem:[#allocation4 + $0x68] sm:$0xff]
    %v230 = vld [vmem:[#allocation4 + $0x70] sm:$0xff]
    %v231 = vld [vmem:[#allocation4 + $0x78] sm:$0xff]
    %v232 = vld [vmem:[%s8] sm:$0x1]
    %v234 = vperm.slane %v232, 0
    %236 = vmatpush.msra.mxu0 %v231
    %237 = vmatpush.msra.mxu0 %v230
    %238 = vmatpush.msra.mxu0 %v229
    %239 = vmatpush.msra.mxu0 %v228
    %240 = vmatpush.msra.mxu0 %v227
    %241 = vmatpush.msra.mxu0 %v226
    %242 = vmatpush.msra.mxu0 %v225
    %243 = vmatpush.msra.mxu0 %v224
    %244 = vmatpush.msra.mxu0 %v223
    %245 = vmatpush.msra.mxu0 %v222
    %246 = vmatpush.msra.mxu0 %v221
    %247 = vmatpush.msra.mxu0 %v220
    %248 = vmatpush.msra.mxu0 %v219
    %249 = vmatpush.msra.mxu0 %v218
    %250 = vmatpush.msra.mxu0 %v217
    %251 = vmatpush.msra.mxu0 %v216
    %252 = vmatmul.f32.gmra.mxu0 %v215
    %v253 = vpop.f32.mrf.mxu0
    %v254 = vadd.f32 %v234, %v253
    %255 = vdwg.mxu0
    %256 = vst [vmem:[%s9] sm:$0xff] %v254
    // Predicated region
    $region46: #{decoder_final_forward.1} parent=1 // pred_check
      _
    $region47: #{decoder_final_forward.1} parent=1 // pred_check_branch
      %258 = sbr.rel (0) target = $region49
    $region48: #{decoder_final_forward.1} parent=1 // pred_region
      _
    $region49: #{decoder_final_forward.1} parent=1 // pred_fallthru
      _
    // Predicated region
    $region50: #{decoder_final_forward.1} parent=1 // pred_check
      _
    $region51: #{decoder_final_forward.1} parent=1 // pred_check_branch
      %260 = sbr.rel (0) target = $region53
    $region52: #{decoder_final_forward.1} parent=1 // pred_region
      _
    $region53: #{decoder_final_forward.1} parent=1 // pred_fallthru
      _
    %261 = vsyncpa [#allocation3], 1
    %262 = vsyncpa [#allocation5], 1

</llo_original>
